<compile_context>
chip_gen: v6e
topology: v6e:2x2x1
jax: 0.10.0
libtpu: 0.0.40
codegen_flags: <defaults>
</compile_context>

<pallas_src>
import functools

import jax
import jax.numpy as jnp
from jax.experimental import pallas as pl
from jax.experimental.pallas import tpu as pltpu

# ----------------------- model hyper-parameters (small) -----------------------
N_NODES = 32
NODE_FEATS = 8
EDGE_FEATS = 8
EDGE_EMB = 8
N_CLASSES = 4
N_LAYERS = 2
N_HEADS = 2
N_HIDDEN = 16
FIRST_HIDDEN = 16

NEG_SLOPE = 0.2
BN_EPS = 1e-5

SLAB_COLS = 128  # one vreg lane-width


# ------------------------- weight-slab row layout ------------------------------
def _slab_layout():
    layout = {}
    r = 0

    def add(name, nrows):
        nonlocal r
        layout[name] = r
        r += -(-nrows // 8) * 8          # pad every block to a sublane multiple

    add("node_w", NODE_FEATS)
    for i in range(N_LAYERS):
        c = FIRST_HIDDEN if i == 0 else N_HEADS * N_HIDDEN
        add(f"wcat{i}", c)
        add(f"wsrct{i}", N_HEADS)
    add("pred_w", N_HEADS * N_HIDDEN)
    add("vec", 8)                         # 8 bias/scale rows (one vreg tile)
    assert 1 + 3 * N_LAYERS + 1 <= 8
    assert 2 * N_HEADS * N_HIDDEN + N_HEADS * N_NODES <= SLAB_COLS
    return layout, r


LAYOUT, SLAB_ROWS = _slab_layout()


# ------------------------------ fused Pallas kernel ----------------------------
def _gipa_fused_kernel(feat_ref, adjw_ref, aedge_ref, w_ref, out_ref, fsrc_blk,
                       *, n_layers, n_heads, n_hidden, first_hidden, layout):
    """h-dependent part of the GIPA forward, fully resident in VMEM."""
    n = adjw_ref.shape[0]
    f = n_hidden
    hf = n_heads * n_hidden
    hn = n_heads * n

    adj_wide = adjw_ref[...]                                   # (N, H*N)
    vec = w_ref[layout["vec"]:layout["vec"] + 8, :]            # (8, 128) bias rows

    # Off-diagonal blocks of the block-diag fsrc scratch stay zero forever.
    fsrc_blk[...] = jnp.zeros_like(fsrc_blk)

    # ---- node encoder + ReLU (input_drop = 0) ----
    node_w = w_ref[layout["node_w"]:layout["node_w"] + feat_ref.shape[1],
                   0:first_hidden]
    h = jnp.dot(feat_ref[...], node_w, preferred_element_type=jnp.float32)
    h = jnp.maximum(h + vec[0:1, 0:first_hidden], 0.0)

    h_last = None
    for i in range(n_layers):
        c = first_hidden if i == 0 else hf
        r = layout[f"wcat{i}"]
        wcat = w_ref[r:r + c, :]                               # (C, 128)
        r = layout[f"wsrct{i}"]
        wsrct = w_ref[r:r + n_heads, 0:c]                      # (H, C)
        vr = 1 + 3 * i
        dst_b = vec[vr:vr + 1, 0:hf]
        gamma = vec[vr + 1:vr + 2, 0:hf]
        beta = vec[vr + 2:vr + 3, 0:hf]

        # ---- all right-projections of h in one MXU pass ----
        #   wcat = [src_fc | dst_fc | attn_dst repeated per head over N cols]
        proj = jnp.dot(h, wcat, preferred_element_type=jnp.float32)   # (N, 128)
        fsrc = proj[:, 0:hf]                                           # (N, H*F)
        fdst = proj[:, hf:2 * hf] + dst_b                              # (N, H*F)
        adst_wide = proj[:, 2 * hf:2 * hf + hn]                        # (N, H*N)

        # attn_src as a (1, H*N) row (no identity-matmul transpose, no eye)
        asrc_rows = jax.lax.dot_general(
            wsrct, h, (((1,), (1,)), ((), ())),
            preferred_element_type=jnp.float32)                        # (H, N)
        asrc_flat = jnp.concatenate(
            [asrc_rows[hd:hd + 1, :] for hd in range(n_heads)], axis=1)  # (1, H*N)

        # ---- lane-dense attention for both heads at once ----
        # e[v, hd*N+u] = attn_src[u,hd] + attn_dst[v,hd] + attn_edge[v,u,hd]
        e = asrc_flat + adst_wide + aedge_ref[i * n:(i + 1) * n, :]
        e = jnp.where(e >= 0.0, e, NEG_SLOPE * e)                       # LeakyReLU
        a = e * adj_wide                                                # mask non-edges

        # ---- block-diagonal fsrc -> ONE aggregation matmul for both heads ----
        for hd in range(n_heads):
            fsrc_blk[hd * n:(hd + 1) * n, hd * f:(hd + 1) * f] = \
                fsrc[:, hd * f:(hd + 1) * f]
        h_new = jnp.dot(a, fsrc_blk[...],
                        preferred_element_type=jnp.float32) + fdst      # (N, H*F)

        if h_last is not None:                                          # residual
            h_new = h_new + h_last
        h_last = h_new

        # ---- BatchNorm1d (training: biased batch stats) + ReLU; dropout p=0 ----
        mean = jnp.mean(h_new, axis=0, keepdims=True)
        d = h_new - mean
        var = jnp.mean(d * d, axis=0, keepdims=True)
        h = jnp.maximum(d * jax.lax.rsqrt(var + BN_EPS) * gamma + beta, 0.0)

    # ---- prediction head ----
    r = layout["pred_w"]
    pred_w = w_ref[r:r + hf, 0:N_CLASSES]
    out = jnp.dot(h, pred_w, preferred_element_type=jnp.float32)
    out_ref[...] = out + vec[1 + 3 * n_layers:2 + 3 * n_layers, 0:N_CLASSES]


def _cost_estimate(n):
    hf = N_HEADS * N_HIDDEN
    hn = N_HEADS * n
    flops = 2 * n * NODE_FEATS * FIRST_HIDDEN
    for i in range(N_LAYERS):
        c = FIRST_HIDDEN if i == 0 else hf
        flops += 2 * n * c * SLAB_COLS          # fused projection
        flops += 2 * N_HEADS * c * n            # attn_src
        flops += 2 * n * hn * hf                # aggregation
        flops += 10 * n * hn                    # attention elementwise path
    flops += 2 * n * hf * N_CLASSES
    bytes_accessed = 4 * (n * NODE_FEATS + n * hn + N_LAYERS * n * hn
                          + SLAB_ROWS * SLAB_COLS + n * N_CLASSES)
    return pl.CostEstimate(flops=int(flops), transcendentals=N_LAYERS * hf,
                           bytes_accessed=int(bytes_accessed))


def gipa_forward(packed, feat, efeat, adj):
    n = feat.shape[0]
    hn = N_HEADS * n
    hi = jax.lax.Precision.HIGHEST

    # h-independent edge-attention logits: tiny XLA matmuls, one 16 KiB slab.
    ef_flat = efeat.reshape(n * n, EDGE_FEATS)
    aedge = []
    for i in range(N_LAYERS):
        ef = jax.nn.relu(jnp.dot(ef_flat, packed["edge_enc_w"][i], precision=hi)
                         + packed["edge_enc_b"][i])                    # (N*N, EE)
        ae = jnp.dot(ef, packed["attn_edge_w"][i], precision=hi)       # (N*N, H)
        aedge.append(ae.reshape(n, n, N_HEADS).transpose(0, 2, 1).reshape(n, hn))
    aedge_all = jnp.concatenate(aedge, axis=0)                          # (L*N, H*N)
    adj_wide = jnp.tile(adj, (1, N_HEADS))                              # (N, H*N)

    kernel = functools.partial(_gipa_fused_kernel, n_layers=N_LAYERS,
                               n_heads=N_HEADS, n_hidden=N_HIDDEN,
                               first_hidden=FIRST_HIDDEN, layout=LAYOUT)
    vmem = lambda: pl.BlockSpec(memory_space=pltpu.MemorySpace.VMEM)
    return pl.pallas_call(
        kernel,
        out_shape=jax.ShapeDtypeStruct((n, N_CLASSES), jnp.float32),
        in_specs=[vmem(), vmem(), vmem(), vmem()],
        out_specs=vmem(),
        scratch_shapes=[pltpu.VMEM((hn, N_HEADS * N_HIDDEN), jnp.float32)],
        cost_estimate=_cost_estimate(n),
    )(feat, adj_wide, aedge_all, packed["wslab"])


# ------------------------------ parameter setup --------------------------------
def _xavier_normal(key, fan_in, fan_out, gain):
    std = gain * (2.0 / (fan_in + fan_out)) ** 0.5
    return std * jax.random.normal(key, (fan_in, fan_out), jnp.float32)


def init_params(key):
    keys = iter(jax.random.split(key, 64))
    gain = 2.0 ** 0.5  # calculate_gain('relu')
    hf = N_HEADS * N_HIDDEN
    p = {
        "node_enc_w": _xavier_normal(next(keys), NODE_FEATS, FIRST_HIDDEN, 1.0),
        "node_enc_b": 0.01 * jax.random.normal(next(keys), (1, FIRST_HIDDEN), jnp.float32),
        "pred_w": _xavier_normal(next(keys), hf, N_CLASSES, 1.0),
        "pred_b": 0.01 * jax.random.normal(next(keys), (1, N_CLASSES), jnp.float32),
        "layers": [],
    }
    for i in range(N_LAYERS):
        in_hidden = FIRST_HIDDEN if i == 0 else hf
        lp = {
            "edge_enc_w": _xavier_normal(next(keys), EDGE_FEATS, EDGE_EMB, 1.0),
            "edge_enc_b": 0.01 * jax.random.normal(next(keys), (1, EDGE_EMB), jnp.float32),
            "src_fc_w": _xavier_normal(next(keys), in_hidden, hf, gain),   # no bias
            "dst_fc_w": _xavier_normal(next(keys), in_hidden, hf, gain),
            "dst_fc_b": 0.01 * jax.random.normal(next(keys), (1, hf), jnp.float32),
            "attn_src_w": _xavier_normal(next(keys), in_hidden, N_HEADS, gain),
            "attn_dst_w": _xavier_normal(next(keys), in_hidden, N_HEADS, gain),
            "attn_edge_w": _xavier_normal(next(keys), EDGE_EMB, N_HEADS, gain),
            "bn_gamma": jnp.ones((1, hf), jnp.float32),
            "bn_beta": jnp.zeros((1, hf), jnp.float32),
        }
        p["layers"].append(lp)
    return p


def _put(slab, r0, arr):
    return slab.at[r0:r0 + arr.shape[0], 0:arr.shape[1]].set(arr)


def pack_params(params):
    """One-time host-side packing: every weight/bias into one (112,128) slab."""
    slab = jnp.zeros((SLAB_ROWS, SLAB_COLS), jnp.float32)
    slab = _put(slab, LAYOUT["node_w"], params["node_enc_w"])
    slab = _put(slab, LAYOUT["pred_w"], params["pred_w"])
    vr = LAYOUT["vec"]
    slab = _put(slab, vr + 0, params["node_enc_b"])
    slab = _put(slab, vr + 1 + 3 * N_LAYERS, params["pred_b"])
    for i, lp in enumerate(params["layers"]):
        # attn_dst pre-broadcast: column hd*N + u holds attn_dst_w[:, hd]
        adst_wide_w = jnp.repeat(lp["attn_dst_w"], N_NODES, axis=1)     # (C, H*N)
        wcat = jnp.concatenate([lp["src_fc_w"], lp["dst_fc_w"], adst_wide_w],
                               axis=1)                                  # (C, 128)
        slab = _put(slab, LAYOUT[f"wcat{i}"], wcat)
        slab = _put(slab, LAYOUT[f"wsrct{i}"], lp["attn_src_w"].T)      # (H, C)
        slab = _put(slab, vr + 1 + 3 * i, lp["dst_fc_b"])
        slab = _put(slab, vr + 2 + 3 * i, lp["bn_gamma"])
        slab = _put(slab, vr + 3 + 3 * i, lp["bn_beta"])
    return {
        "wslab": slab,
        "edge_enc_w": [lp["edge_enc_w"] for lp in params["layers"]],
        "edge_enc_b": [lp["edge_enc_b"] for lp in params["layers"]],
        "attn_edge_w": [lp["attn_edge_w"] for lp in params["layers"]],
    }


# --------------------------- pure-JAX reference (check) -------------------------
def gipa_forward_ref(params, feat, efeat, adj):
    hi = jax.lax.Precision.HIGHEST
    n = feat.shape[0]
    hh, ff = N_HEADS, N_HIDDEN
    h = jax.nn.relu(jnp.dot(feat, params["node_enc_w"], precision=hi)
                    + params["node_enc_b"])
    ef_flat = efeat.reshape(n * n, EDGE_FEATS)
    h_last = None
    for lp in params["layers"]:
        ef = jax.nn.relu(jnp.dot(ef_flat, lp["edge_enc_w"], precision=hi)
                         + lp["edge_enc_b"])
        fsrc = jnp.dot(h, lp["src_fc_w"], precision=hi).reshape(n, hh, ff)
        fdst = (jnp.dot(h, lp["dst_fc_w"], precision=hi)
                + lp["dst_fc_b"]).reshape(n, hh, ff)
        asrc = jnp.dot(h, lp["attn_src_w"], precision=hi)          # (N, H)
        adst = jnp.dot(h, lp["attn_dst_w"], precision=hi)          # (N, H)
        aedge = jnp.dot(ef, lp["attn_edge_w"], precision=hi).reshape(n, n, hh)
        e = asrc[None, :, :] + adst[:, None, :] + aedge            # (dst, src, H)
        e = jnp.where(e >= 0, e, NEG_SLOPE * e)
        a = e * adj[:, :, None]
        agg = jnp.einsum("vuh,uhf->vhf", a, fsrc, precision=hi)
        h = (agg + fdst).reshape(n, hh * ff)
        if h_last is not None:
            h = h + h_last
        h_last = h
        mean = h.mean(axis=0, keepdims=True)
        var = ((h - mean) ** 2).mean(axis=0, keepdims=True)
        h = jax.nn.relu((h - mean) * jax.lax.rsqrt(var + BN_EPS)
                        * lp["bn_gamma"] + lp["bn_beta"])
    return jnp.dot(h, params["pred_w"], precision=hi) + params["pred_b"]


# ----------------------------------- main ---------------------------------------
if __name__ == "__main__":
    key = jax.random.PRNGKey(0)
    k_feat, k_efeat, k_adj, k_param = jax.random.split(key, 4)

    feat = jax.random.normal(k_feat, (N_NODES, NODE_FEATS), jnp.float32)
    efeat = jax.random.normal(k_efeat, (N_NODES, N_NODES, EDGE_FEATS), jnp.float32)

    # random sparse adjacency (adj[v, u] = 1 iff edge u -> v), plus self-loops
    adj = (jax.random.uniform(k_adj, (N_NODES, N_NODES)) < 0.25).astype(jnp.float32)
    adj = jnp.maximum(adj, jnp.eye(N_NODES, dtype=jnp.float32))

    params = init_params(k_param)
    packed = pack_params(params)                       # one-time weight packing

    out = jax.jit(gipa_forward)(packed, feat, efeat, adj)
    out = jax.block_until_ready(out)

    assert out.shape == (N_NODES, N_CLASSES)
    assert bool(jnp.all(jnp.isfinite(out)))

    ref = gipa_forward_ref(params, feat, efeat, adj)
    assert bool(jnp.allclose(out, ref, rtol=2e-2, atol=2e-2)), \
        float(jnp.max(jnp.abs(out - ref)))

    print("KERNEL_OK")
</pallas_src>

<mosaic_0001>
module attributes {stable_mosaic.version = 11 : i64} {
  func.func @_gipa_fused_kernel(%arg0: memref<32x8xf32, #tpu.memory_space<vmem>>, %arg1: memref<32x64xf32, #tpu.memory_space<vmem>>, %arg2: memref<64x64xf32, #tpu.memory_space<vmem>>, %arg3: memref<112x128xf32, #tpu.memory_space<vmem>>, %arg4: memref<32x4xf32, #tpu.memory_space<vmem>>, %arg5: memref<64x32xf32, #tpu.memory_space<vmem>>) attributes {dimension_semantics = [], scalar_prefetch = 0 : i64, scratch_operands = 1 : i64, tpu.core_type = #tpu.core_type<tc>} {
    %c0 = arith.constant 0 : index
    %c0_0 = arith.constant 0 : index
    %0 = vector.load %arg1[%c0, %c0_0] : memref<32x64xf32, #tpu.memory_space<vmem>>, vector<32x64xf32>
    %c104 = arith.constant 104 : index
    %c0_1 = arith.constant 0 : index
    %1 = vector.load %arg3[%c104, %c0_1] : memref<112x128xf32, #tpu.memory_space<vmem>>, vector<8x128xf32>
    %cst = arith.constant 0.000000e+00 : f32
    %2 = vector.broadcast %cst : f32 to vector<64x32xf32>
    %c0_2 = arith.constant 0 : index
    %c0_3 = arith.constant 0 : index
    %3 = vector.load %arg5[%c0_2, %c0_3] : memref<64x32xf32, #tpu.memory_space<vmem>>, vector<64x32xf32>
    tpu.vector_store %arg5[%c0_2, %c0_3], %2 {strides = array<i32>} : memref<64x32xf32, #tpu.memory_space<vmem>>, vector<64x32xf32>,
    %c0_4 = arith.constant 0 : index
    %c0_5 = arith.constant 0 : index
    %4 = vector.load %arg3[%c0_4, %c0_5] : memref<112x128xf32, #tpu.memory_space<vmem>>, vector<8x16xf32>
    %c0_6 = arith.constant 0 : index
    %c0_7 = arith.constant 0 : index
    %5 = vector.load %arg0[%c0_6, %c0_7] : memref<32x8xf32, #tpu.memory_space<vmem>>, vector<32x8xf32>
    %cst_8 = arith.constant dense<0.000000e+00> : vector<32x16xf32>
    %6 = tpu.matmul %5, %4, %cst_8 {dimension_numbers = #tpu.dot_dimension_numbers<[1], [0], [0], [1], [0, 0, 1, 1], [], []>} : vector<32x8xf32>, vector<8x16xf32>, vector<32x16xf32> -> vector<32x16xf32>
    %7 = vector.extract_strided_slice %1 {offsets = [0, 0], sizes = [1, 16], strides = [1, 1]} : vector<8x128xf32> to vector<1x16xf32>
    %8 = vector.broadcast %7 : vector<1x16xf32> to vector<32x16xf32>
    %9 = arith.addf %6, %8 : vector<32x16xf32>
    %cst_9 = arith.constant 0.000000e+00 : f32
    %10 = vector.broadcast %cst_9 : f32 to vector<32x16xf32>
    %11 = arith.maximumf %9, %10 : vector<32x16xf32>
    %c8 = arith.constant 8 : index
    %c0_10 = arith.constant 0 : index
    %12 = vector.load %arg3[%c8, %c0_10] : memref<112x128xf32, #tpu.memory_space<vmem>>, vector<16x128xf32>
    %c24 = arith.constant 24 : index
    %c0_11 = arith.constant 0 : index
    %13 = vector.load %arg3[%c24, %c0_11] : memref<112x128xf32, #tpu.memory_space<vmem>>, vector<2x16xf32>
    %14 = vector.extract_strided_slice %1 {offsets = [1, 0], sizes = [1, 32], strides = [1, 1]} : vector<8x128xf32> to vector<1x32xf32>
    %15 = vector.extract_strided_slice %1 {offsets = [2, 0], sizes = [1, 32], strides = [1, 1]} : vector<8x128xf32> to vector<1x32xf32>
    %16 = vector.extract_strided_slice %1 {offsets = [3, 0], sizes = [1, 32], strides = [1, 1]} : vector<8x128xf32> to vector<1x32xf32>
    %cst_12 = arith.constant dense<0.000000e+00> : vector<32x128xf32>
    %17 = tpu.matmul %11, %12, %cst_12 {dimension_numbers = #tpu.dot_dimension_numbers<[1], [0], [0], [1], [0, 0, 1, 1], [], []>} : vector<32x16xf32>, vector<16x128xf32>, vector<32x128xf32> -> vector<32x128xf32>
    %18 = vector.extract_strided_slice %17 {offsets = [0, 0], sizes = [32, 32], strides = [1, 1]} : vector<32x128xf32> to vector<32x32xf32>
    %19 = vector.extract_strided_slice %17 {offsets = [0, 32], sizes = [32, 32], strides = [1, 1]} : vector<32x128xf32> to vector<32x32xf32>
    %20 = vector.broadcast %14 : vector<1x32xf32> to vector<32x32xf32>
    %21 = arith.addf %19, %20 : vector<32x32xf32>
    %22 = vector.extract_strided_slice %17 {offsets = [0, 64], sizes = [32, 64], strides = [1, 1]} : vector<32x128xf32> to vector<32x64xf32>
    %cst_13 = arith.constant dense<0.000000e+00> : vector<2x32xf32>
    %23 = tpu.matmul %13, %11, %cst_13 {dimension_numbers = #tpu.dot_dimension_numbers<[1], [1], [0], [0], [0, 0, 1, 0], [], []>} : vector<2x16xf32>, vector<32x16xf32>, vector<2x32xf32> -> vector<2x32xf32>
    %24 = vector.extract_strided_slice %23 {offsets = [0, 0], sizes = [1, 32], strides = [1, 1]} : vector<2x32xf32> to vector<1x32xf32>
    %25 = vector.extract_strided_slice %23 {offsets = [1, 0], sizes = [1, 32], strides = [1, 1]} : vector<2x32xf32> to vector<1x32xf32>
    %26 = tpu.concatenate %24, %25 in 1 : vector<1x32xf32>, vector<1x32xf32> -> vector<1x64xf32>
    %27 = vector.broadcast %26 : vector<1x64xf32> to vector<32x64xf32>
    %28 = arith.addf %27, %22 : vector<32x64xf32>
    %c0_14 = arith.constant 0 : index
    %c0_15 = arith.constant 0 : index
    %29 = vector.load %arg2[%c0_14, %c0_15] : memref<64x64xf32, #tpu.memory_space<vmem>>, vector<32x64xf32>
    %30 = arith.addf %28, %29 : vector<32x64xf32>
    %cst_16 = arith.constant 0.000000e+00 : f32
    %31 = vector.broadcast %cst_16 : f32 to vector<32x64xf32>
    %32 = arith.cmpf oge, %30, %31 : vector<32x64xf32>
    %cst_17 = arith.constant 2.000000e-01 : f32
    %33 = vector.broadcast %cst_17 : f32 to vector<32x64xf32>
    %34 = arith.mulf %33, %30 : vector<32x64xf32>
    %35 = arith.select %32, %30, %34 : vector<32x64xi1>, vector<32x64xf32>
    %36 = arith.mulf %35, %0 : vector<32x64xf32>
    %37 = vector.extract_strided_slice %18 {offsets = [0, 0], sizes = [32, 16], strides = [1, 1]} : vector<32x32xf32> to vector<32x16xf32>
    %c0_18 = arith.constant 0 : index
    %c0_19 = arith.constant 0 : index
    %38 = vector.load %arg5[%c0_18, %c0_19] : memref<64x32xf32, #tpu.memory_space<vmem>>, vector<32x16xf32>
    tpu.vector_store %arg5[%c0_18, %c0_19], %37 {strides = array<i32>} : memref<64x32xf32, #tpu.memory_space<vmem>>, vector<32x16xf32>,
    %39 = vector.extract_strided_slice %18 {offsets = [0, 16], sizes = [32, 16], strides = [1, 1]} : vector<32x32xf32> to vector<32x16xf32>
    %c32 = arith.constant 32 : index
    %c16 = arith.constant 16 : index
    %40 = vector.load %arg5[%c32, %c16] : memref<64x32xf32, #tpu.memory_space<vmem>>, vector<32x16xf32>
    tpu.vector_store %arg5[%c32, %c16], %39 {strides = array<i32>} : memref<64x32xf32, #tpu.memory_space<vmem>>, vector<32x16xf32>,
    %c0_20 = arith.constant 0 : index
    %c0_21 = arith.constant 0 : index
    %41 = vector.load %arg5[%c0_20, %c0_21] : memref<64x32xf32, #tpu.memory_space<vmem>>, vector<64x32xf32>
    %cst_22 = arith.constant dense<0.000000e+00> : vector<32x32xf32>
    %42 = tpu.matmul %36, %41, %cst_22 {dimension_numbers = #tpu.dot_dimension_numbers<[1], [0], [0], [1], [0, 0, 1, 1], [], []>} : vector<32x64xf32>, vector<64x32xf32>, vector<32x32xf32> -> vector<32x32xf32>
    %43 = arith.addf %42, %21 : vector<32x32xf32>
    %cst_23 = arith.constant dense<0.000000e+00> : vector<32xf32>
    %44 = vector.multi_reduction <add>, %43, %cst_23 [0] : vector<32x32xf32> to vector<32xf32>
    %45 = vector.shape_cast %44 : vector<32xf32> to vector<1x32xf32>
    %cst_24 = arith.constant 3.200000e+01 : f32
    %46 = vector.broadcast %cst_24 : f32 to vector<1x32xf32>
    %47 = arith.divf %45, %46 : vector<1x32xf32>
    %48 = vector.broadcast %47 : vector<1x32xf32> to vector<32x32xf32>
    %49 = arith.subf %43, %48 : vector<32x32xf32>
    %50 = arith.mulf %49, %49 : vector<32x32xf32>
    %cst_25 = arith.constant dense<0.000000e+00> : vector<32xf32>
    %51 = vector.multi_reduction <add>, %50, %cst_25 [0] : vector<32x32xf32> to vector<32xf32>
    %52 = vector.shape_cast %51 : vector<32xf32> to vector<1x32xf32>
    %cst_26 = arith.constant 3.200000e+01 : f32
    %53 = vector.broadcast %cst_26 : f32 to vector<1x32xf32>
    %54 = arith.divf %52, %53 : vector<1x32xf32>
    %cst_27 = arith.constant 9.99999974E-6 : f32
    %55 = vector.broadcast %cst_27 : f32 to vector<1x32xf32>
    %56 = arith.addf %54, %55 : vector<1x32xf32>
    %57 = math.rsqrt %56 : vector<1x32xf32>
    %58 = vector.broadcast %57 : vector<1x32xf32> to vector<32x32xf32>
    %59 = arith.mulf %49, %58 : vector<32x32xf32>
    %60 = vector.broadcast %15 : vector<1x32xf32> to vector<32x32xf32>
    %61 = arith.mulf %59, %60 : vector<32x32xf32>
    %62 = vector.broadcast %16 : vector<1x32xf32> to vector<32x32xf32>
    %63 = arith.addf %61, %62 : vector<32x32xf32>
    %cst_28 = arith.constant 0.000000e+00 : f32
    %64 = vector.broadcast %cst_28 : f32 to vector<32x32xf32>
    %65 = arith.maximumf %63, %64 : vector<32x32xf32>
    %c32_29 = arith.constant 32 : index
    %c0_30 = arith.constant 0 : index
    %66 = vector.load %arg3[%c32_29, %c0_30] : memref<112x128xf32, #tpu.memory_space<vmem>>, vector<32x128xf32>
    %c64 = arith.constant 64 : index
    %c0_31 = arith.constant 0 : index
    %67 = vector.load %arg3[%c64, %c0_31] : memref<112x128xf32, #tpu.memory_space<vmem>>, vector<2x32xf32>
    %68 = vector.extract_strided_slice %1 {offsets = [4, 0], sizes = [1, 32], strides = [1, 1]} : vector<8x128xf32> to vector<1x32xf32>
    %69 = vector.extract_strided_slice %1 {offsets = [5, 0], sizes = [1, 32], strides = [1, 1]} : vector<8x128xf32> to vector<1x32xf32>
    %70 = vector.extract_strided_slice %1 {offsets = [6, 0], sizes = [1, 32], strides = [1, 1]} : vector<8x128xf32> to vector<1x32xf32>
    %cst_32 = arith.constant dense<0.000000e+00> : vector<32x128xf32>
    %71 = tpu.matmul %65, %66, %cst_32 {dimension_numbers = #tpu.dot_dimension_numbers<[1], [0], [0], [1], [0, 0, 1, 1], [], []>} : vector<32x32xf32>, vector<32x128xf32>, vector<32x128xf32> -> vector<32x128xf32>
    %72 = vector.extract_strided_slice %71 {offsets = [0, 0], sizes = [32, 32], strides = [1, 1]} : vector<32x128xf32> to vector<32x32xf32>
    %73 = vector.extract_strided_slice %71 {offsets = [0, 32], sizes = [32, 32], strides = [1, 1]} : vector<32x128xf32> to vector<32x32xf32>
    %74 = vector.broadcast %68 : vector<1x32xf32> to vector<32x32xf32>
    %75 = arith.addf %73, %74 : vector<32x32xf32>
    %76 = vector.extract_strided_slice %71 {offsets = [0, 64], sizes = [32, 64], strides = [1, 1]} : vector<32x128xf32> to vector<32x64xf32>
    %cst_33 = arith.constant dense<0.000000e+00> : vector<2x32xf32>
    %77 = tpu.matmul %67, %65, %cst_33 {dimension_numbers = #tpu.dot_dimension_numbers<[1], [1], [0], [0], [0, 0, 1, 0], [], []>} : vector<2x32xf32>, vector<32x32xf32>, vector<2x32xf32> -> vector<2x32xf32>
    %78 = vector.extract_strided_slice %77 {offsets = [0, 0], sizes = [1, 32], strides = [1, 1]} : vector<2x32xf32> to vector<1x32xf32>
    %79 = vector.extract_strided_slice %77 {offsets = [1, 0], sizes = [1, 32], strides = [1, 1]} : vector<2x32xf32> to vector<1x32xf32>
    %80 = tpu.concatenate %78, %79 in 1 : vector<1x32xf32>, vector<1x32xf32> -> vector<1x64xf32>
    %81 = vector.broadcast %80 : vector<1x64xf32> to vector<32x64xf32>
    %82 = arith.addf %81, %76 : vector<32x64xf32>
    %c32_34 = arith.constant 32 : index
    %c0_35 = arith.constant 0 : index
    %83 = vector.load %arg2[%c32_34, %c0_35] : memref<64x64xf32, #tpu.memory_space<vmem>>, vector<32x64xf32>
    %84 = arith.addf %82, %83 : vector<32x64xf32>
    %cst_36 = arith.constant 0.000000e+00 : f32
    %85 = vector.broadcast %cst_36 : f32 to vector<32x64xf32>
    %86 = arith.cmpf oge, %84, %85 : vector<32x64xf32>
    %cst_37 = arith.constant 2.000000e-01 : f32
    %87 = vector.broadcast %cst_37 : f32 to vector<32x64xf32>
    %88 = arith.mulf %87, %84 : vector<32x64xf32>
    %89 = arith.select %86, %84, %88 : vector<32x64xi1>, vector<32x64xf32>
    %90 = arith.mulf %89, %0 : vector<32x64xf32>
    %91 = vector.extract_strided_slice %72 {offsets = [0, 0], sizes = [32, 16], strides = [1, 1]} : vector<32x32xf32> to vector<32x16xf32>
    %c0_38 = arith.constant 0 : index
    %c0_39 = arith.constant 0 : index
    %92 = vector.load %arg5[%c0_38, %c0_39] : memref<64x32xf32, #tpu.memory_space<vmem>>, vector<32x16xf32>
    tpu.vector_store %arg5[%c0_38, %c0_39], %91 {strides = array<i32>} : memref<64x32xf32, #tpu.memory_space<vmem>>, vector<32x16xf32>,
    %93 = vector.extract_strided_slice %72 {offsets = [0, 16], sizes = [32, 16], strides = [1, 1]} : vector<32x32xf32> to vector<32x16xf32>
    %c32_40 = arith.constant 32 : index
    %c16_41 = arith.constant 16 : index
    %94 = vector.load %arg5[%c32_40, %c16_41] : memref<64x32xf32, #tpu.memory_space<vmem>>, vector<32x16xf32>
    tpu.vector_store %arg5[%c32_40, %c16_41], %93 {strides = array<i32>} : memref<64x32xf32, #tpu.memory_space<vmem>>, vector<32x16xf32>,
    %c0_42 = arith.constant 0 : index
    %c0_43 = arith.constant 0 : index
    %95 = vector.load %arg5[%c0_42, %c0_43] : memref<64x32xf32, #tpu.memory_space<vmem>>, vector<64x32xf32>
    %cst_44 = arith.constant dense<0.000000e+00> : vector<32x32xf32>
    %96 = tpu.matmul %90, %95, %cst_44 {dimension_numbers = #tpu.dot_dimension_numbers<[1], [0], [0], [1], [0, 0, 1, 1], [], []>} : vector<32x64xf32>, vector<64x32xf32>, vector<32x32xf32> -> vector<32x32xf32>
    %97 = arith.addf %96, %75 : vector<32x32xf32>
    %98 = arith.addf %97, %43 : vector<32x32xf32>
    %cst_45 = arith.constant dense<0.000000e+00> : vector<32xf32>
    %99 = vector.multi_reduction <add>, %98, %cst_45 [0] : vector<32x32xf32> to vector<32xf32>
    %100 = vector.shape_cast %99 : vector<32xf32> to vector<1x32xf32>
    %cst_46 = arith.constant 3.200000e+01 : f32
    %101 = vector.broadcast %cst_46 : f32 to vector<1x32xf32>
    %102 = arith.divf %100, %101 : vector<1x32xf32>
    %103 = vector.broadcast %102 : vector<1x32xf32> to vector<32x32xf32>
    %104 = arith.subf %98, %103 : vector<32x32xf32>
    %105 = arith.mulf %104, %104 : vector<32x32xf32>
    %cst_47 = arith.constant dense<0.000000e+00> : vector<32xf32>
    %106 = vector.multi_reduction <add>, %105, %cst_47 [0] : vector<32x32xf32> to vector<32xf32>
    %107 = vector.shape_cast %106 : vector<32xf32> to vector<1x32xf32>
    %cst_48 = arith.constant 3.200000e+01 : f32
    %108 = vector.broadcast %cst_48 : f32 to vector<1x32xf32>
    %109 = arith.divf %107, %108 : vector<1x32xf32>
    %cst_49 = arith.constant 9.99999974E-6 : f32
    %110 = vector.broadcast %cst_49 : f32 to vector<1x32xf32>
    %111 = arith.addf %109, %110 : vector<1x32xf32>
    %112 = math.rsqrt %111 : vector<1x32xf32>
    %113 = vector.broadcast %112 : vector<1x32xf32> to vector<32x32xf32>
    %114 = arith.mulf %104, %113 : vector<32x32xf32>
    %115 = vector.broadcast %69 : vector<1x32xf32> to vector<32x32xf32>
    %116 = arith.mulf %114, %115 : vector<32x32xf32>
    %117 = vector.broadcast %70 : vector<1x32xf32> to vector<32x32xf32>
    %118 = arith.addf %116, %117 : vector<32x32xf32>
    %cst_50 = arith.constant 0.000000e+00 : f32
    %119 = vector.broadcast %cst_50 : f32 to vector<32x32xf32>
    %120 = arith.maximumf %118, %119 : vector<32x32xf32>
    %c72 = arith.constant 72 : index
    %c0_51 = arith.constant 0 : index
    %121 = vector.load %arg3[%c72, %c0_51] : memref<112x128xf32, #tpu.memory_space<vmem>>, vector<32x4xf32>
    %cst_52 = arith.constant dense<0.000000e+00> : vector<32x4xf32>
    %122 = tpu.matmul %120, %121, %cst_52 {dimension_numbers = #tpu.dot_dimension_numbers<[1], [0], [0], [1], [0, 0, 1, 1], [], []>} : vector<32x32xf32>, vector<32x4xf32>, vector<32x4xf32> -> vector<32x4xf32>
    %123 = vector.extract_strided_slice %1 {offsets = [7, 0], sizes = [1, 4], strides = [1, 1]} : vector<8x128xf32> to vector<1x4xf32>
    %124 = vector.broadcast %123 : vector<1x4xf32> to vector<32x4xf32>
    %125 = arith.addf %122, %124 : vector<32x4xf32>
    %c0_53 = arith.constant 0 : index
    %c0_54 = arith.constant 0 : index
    %126 = vector.load %arg4[%c0_53, %c0_54] : memref<32x4xf32, #tpu.memory_space<vmem>>, vector<32x4xf32>
    tpu.vector_store %arg4[%c0_53, %c0_54], %125 {strides = array<i32>} : memref<32x4xf32, #tpu.memory_space<vmem>>, vector<32x4xf32>,
    return
  }
}

</mosaic_0001>

<llo_original>
// kernel: gipa_forward.1
$region0: #{gipa_forward.1}
  #allocation0 [shape = 'u32[]', space=smem, size = 0x4, offset = 0x4, fixed_abs, tag = 'smem constant byte address 0x4 - core index']
  #allocation1 [shape = 'u32[144,128]{1,0:T(1,128)}', space=vmem, size = 0x12000, scoped, tag = 'internal scratch']
  #allocation2 [shape = 'f32[64,32]{1,0:T(8,128)}', space=vmem, size = 0x8000, scoped, tag = 'scratch operand']
  %s0 = inlined_call_operand.vmem [shape: f32[32,8], index: 0, kind: input, shape index: {}]
  %s1 = inlined_call_operand.vmem [shape: f32[32,64], index: 1, kind: input, shape index: {}]
  %s2 = inlined_call_operand.vmem [shape: f32[64,64], index: 2, kind: input, shape index: {}]
  %s3 = inlined_call_operand.vmem [shape: f32[112,128], index: 3, kind: input, shape index: {}]
  %s4 = inlined_call_operand.vmem [shape: f32[32,4], index: 4, kind: output, shape index: {}]
  %s5 = sld [smem:[#allocation0]]
  $region26: #{gipa_forward.1} parent=0
    _
  %s7 = ssub.s32 1, %s5
  %s8 = scalar_select 0, %s7, %s5
  // Predicated region
  $region2: #{gipa_forward.1} parent=0 // pred_check
    _
  $region3: #{gipa_forward.1} parent=0 // pred_check_branch
    %10 = sbr.rel (0) target = $region5
  $region4: #{gipa_forward.1} parent=0 // pred_region
    _
  $region5: #{gipa_forward.1} parent=0 // pred_fallthru
    _
  // Predicated region
  $region6: #{gipa_forward.1} parent=0 // pred_check
    _
  $region7: #{gipa_forward.1} parent=0 // pred_check_branch
    %12 = sbr.rel (0) target = $region9
  $region8: #{gipa_forward.1} parent=0 // pred_region
    _
  $region9: #{gipa_forward.1} parent=0 // pred_fallthru
    _
  // Predicated region
  $region10: #{gipa_forward.1} parent=0 // pred_check
    _
  $region11: #{gipa_forward.1} parent=0 // pred_check_branch
    %14 = sbr.rel (0) target = $region13
  $region12: #{gipa_forward.1} parent=0 // pred_region
    _
  $region13: #{gipa_forward.1} parent=0 // pred_fallthru
    _
  // Predicated region
  $region14: #{gipa_forward.1} parent=0 // pred_check
    _
  $region15: #{gipa_forward.1} parent=0 // pred_check_branch
    %16 = sbr.rel (0) target = $region17
  $region16: #{gipa_forward.1} parent=0 // pred_region
    _
  $region17: #{gipa_forward.1} parent=0 // pred_fallthru
    _
  %v17 = vld [vmem:[%s1] sm:$0xff]
  %v18 = vld [vmem:[%s1 + $0x8] sm:$0xff]
  %v19 = vld [vmem:[%s1 + $0x10] sm:$0xff]
  %v20 = vld [vmem:[%s1 + $0x18] sm:$0xff]
  %v21 = vld [vmem:[%s3 + $0x68] sm:$0xff]
  %vm22 = vcmask 261120
  %23 = vst.msk [vmem:[#allocation2] sm:$0xff] %vm22, 0.0
  %24 = vst.msk [vmem:[#allocation2 + $0x8] sm:$0xff] %vm22, 0.0
  %25 = vst.msk [vmem:[#allocation2 + $0x10] sm:$0xff] %vm22, 0.0
  %26 = vst.msk [vmem:[#allocation2 + $0x18] sm:$0xff] %vm22, 0.0
  %27 = vst.msk [vmem:[#allocation2 + $0x20] sm:$0xff] %vm22, 0.0
  %28 = vst.msk [vmem:[#allocation2 + $0x28] sm:$0xff] %vm22, 0.0
  %29 = vst.msk [vmem:[#allocation2 + $0x30] sm:$0xff] %vm22, 0.0
  %30 = vst.msk [vmem:[#allocation2 + $0x38] sm:$0xff] %vm22, 0.0
  %v31 = vld [vmem:[%s3] sm:$0xff]
  %v32 = vld [vmem:[%s0] sm:$0xff]
  %v33 = vld [vmem:[%s0 + $0x8] sm:$0xff]
  %v34 = vld [vmem:[%s0 + $0x10] sm:$0xff]
  %v35 = vld [vmem:[%s0 + $0x18] sm:$0xff]
  %v36 = vlaneseq
  %v37 = vshrl.u32 %v36, 7
  %v38 = vsub.s32 0, %v37
  %v39 = vrot.slane %v21, %v38
  %vm40 = vcmask 64512
  %v42 = vsel %vm40, %v32, 0
  %v45 = vsel %vm40, %v33, 0
  %v48 = vsel %vm40, %v34, 0
  %v51 = vsel %vm40, %v35, 0
  %53 = vmatprep.subr.mxu0 0.0
  %54 = vmatpush1.msra.mxu0 0.0
  %55 = vmatprep.subr.mxu0 0.0
  %56 = vmatpush1.msra.mxu0 0.0
  %57 = vmatprep.subr.mxu0 0.0
  %58 = vmatpush1.msra.mxu0 0.0
  %59 = vmatprep.subr.mxu0 0.0
  %60 = vmatpush1.msra.mxu0 0.0
  %61 = vmatprep.subr.mxu0 0.0
  %62 = vmatpush1.msra.mxu0 0.0
  %63 = vmatprep.subr.mxu0 0.0
  %64 = vmatpush1.msra.mxu0 0.0
  %65 = vmatprep.subr.mxu0 0.0
  %66 = vmatpush1.msra.mxu0 0.0
  %67 = vmatprep.subr.mxu0 0.0
  %68 = vmatpush1.msra.mxu0 0.0
  %69 = vmatprep.subr.mxu0 0.0
  %70 = vmatpush1.msra.mxu0 0.0
  %71 = vmatprep.subr.mxu0 0.0
  %72 = vmatpush1.msra.mxu0 0.0
  %73 = vmatprep.subr.mxu0 0.0
  %74 = vmatpush1.msra.mxu0 0.0
  %75 = vmatprep.subr.mxu0 0.0
  %76 = vmatpush1.msra.mxu0 0.0
  %77 = vmatprep.subr.mxu0 0.0
  %78 = vmatpush1.msra.mxu0 0.0
  %79 = vmatprep.subr.mxu0 0.0
  %80 = vmatpush1.msra.mxu0 0.0
  %81 = vmatprep.subr.mxu0 0.0
  %82 = vmatpush1.msra.mxu0 0.0
  %83 = vmatprep.subr.mxu0 0.0
  %84 = vmatpush1.msra.mxu0 %v31
  %85 = vmatprep.subr.mxu0 0.0
  %86 = vmatpush2.msra.mxu0 0.0
  %87 = vmatprep.subr.mxu0 0.0
  %88 = vmatpush2.msra.mxu0 0.0
  %89 = vmatprep.subr.mxu0 0.0
  %90 = vmatpush2.msra.mxu0 0.0
  %91 = vmatprep.subr.mxu0 0.0
  %92 = vmatpush2.msra.mxu0 0.0
  %93 = vmatprep.subr.mxu0 0.0
  %94 = vmatpush2.msra.mxu0 0.0
  %95 = vmatprep.subr.mxu0 0.0
  %96 = vmatpush2.msra.mxu0 0.0
  %97 = vmatprep.subr.mxu0 0.0
  %98 = vmatpush2.msra.mxu0 0.0
  %99 = vmatprep.subr.mxu0 0.0
  %100 = vmatpush2.msra.mxu0 0.0
  %101 = vmatprep.subr.mxu0 0.0
  %102 = vmatpush2.msra.mxu0 0.0
  %103 = vmatprep.subr.mxu0 0.0
  %104 = vmatpush2.msra.mxu0 0.0
  %105 = vmatprep.subr.mxu0 0.0
  %106 = vmatpush2.msra.mxu0 0.0
  %107 = vmatprep.subr.mxu0 0.0
  %108 = vmatpush2.msra.mxu0 0.0
  %109 = vmatprep.subr.mxu0 0.0
  %110 = vmatpush2.msra.mxu0 0.0
  %111 = vmatprep.subr.mxu0 0.0
  %112 = vmatpush2.msra.mxu0 0.0
  %113 = vmatprep.subr.mxu0 0.0
  %114 = vmatpush2.msra.mxu0 0.0
  %115 = vmatprep.subr.mxu0 0.0
  %116 = vmatpush2.msra.mxu0 0.0
  %117 = vmatprep.mubr.f32.mxu0 0.0
  %118 = vmatmul.mubr.f32.gmra.mxu0 %v42
  %v119 = vpop.f32.mrf.mxu0
  %v120 = vadd.f32 %v39, %v119
  %v121 = vpop.f32.mrf.mxu0
  %122 = vmatprep.mubr.f32.mxu0 0.0
  %123 = vmatmul.mubr.f32.gmra.mxu0 %v45
  %v124 = vpop.f32.mrf.mxu0
  %v125 = vadd.f32 %v39, %v124
  %v126 = vpop.f32.mrf.mxu0
  %127 = vmatprep.mubr.f32.mxu0 0.0
  %128 = vmatmul.mubr.f32.gmra.mxu0 %v48
  %v129 = vpop.f32.mrf.mxu0
  %v130 = vadd.f32 %v39, %v129
  %v131 = vpop.f32.mrf.mxu0
  %132 = vmatprep.mubr.f32.mxu0 0.0
  %133 = vmatmul.mubr.f32.gmra.mxu0 %v51
  %v134 = vpop.f32.mrf.mxu0
  %v135 = vadd.f32 %v39, %v134
  %v136 = vpop.f32.mrf.mxu0
  %137 = vdwg.mxu0
  %v138 = vmax.f32 %v120, 0.0
  %v139 = vmax.f32 %v125, 0.0
  %v140 = vmax.f32 %v130, 0.0
  %v141 = vmax.f32 %v135, 0.0
  %v142 = vld [vmem:[%s3 + $0x8] sm:$0xff]
  %v143 = vld [vmem:[%s3 + $0x10] sm:$0xff]
  %v144 = vld [vmem:[%s3 + $0x18] sm:$0x3]
  %vm145 = vcmask 130048
  %v147 = vsel %vm145, %v138, 0
  %v150 = vsel %vm145, %v139, 0
  %v153 = vsel %vm145, %v140, 0
  %v156 = vsel %vm145, %v141, 0
  %158 = vmatprep.subr.mxu0 0.0
  %159 = vmatpush1.msra.mxu0 0.0
  %160 = vmatprep.subr.mxu0 0.0
  %161 = vmatpush1.msra.mxu0 0.0
  %162 = vmatprep.subr.mxu0 0.0
  %163 = vmatpush1.msra.mxu0 0.0
  %164 = vmatprep.subr.mxu0 0.0
  %165 = vmatpush1.msra.mxu0 0.0
  %166 = vmatprep.subr.mxu0 0.0
  %167 = vmatpush1.msra.mxu0 0.0
  %168 = vmatprep.subr.mxu0 0.0
  %169 = vmatpush1.msra.mxu0 0.0
  %170 = vmatprep.subr.mxu0 0.0
  %171 = vmatpush1.msra.mxu0 0.0
  %172 = vmatprep.subr.mxu0 0.0
  %173 = vmatpush1.msra.mxu0 0.0
  %174 = vmatprep.subr.mxu0 0.0
  %175 = vmatpush1.msra.mxu0 0.0
  %176 = vmatprep.subr.mxu0 0.0
  %177 = vmatpush1.msra.mxu0 0.0
  %178 = vmatprep.subr.mxu0 0.0
  %179 = vmatpush1.msra.mxu0 0.0
  %180 = vmatprep.subr.mxu0 0.0
  %181 = vmatpush1.msra.mxu0 0.0
  %182 = vmatprep.subr.mxu0 0.0
  %183 = vmatpush1.msra.mxu0 0.0
  %184 = vmatprep.subr.mxu0 0.0
  %185 = vmatpush1.msra.mxu0 0.0
  %186 = vmatprep.subr.mxu0 0.0
  %187 = vmatpush1.msra.mxu0 %v143
  %188 = vmatprep.subr.mxu0 0.0
  %189 = vmatpush1.msra.mxu0 %v142
  %190 = vmatprep.subr.mxu0 0.0
  %191 = vmatpush2.msra.mxu0 0.0
  %192 = vmatprep.subr.mxu0 0.0
  %193 = vmatpush2.msra.mxu0 0.0
  %194 = vmatprep.subr.mxu0 0.0
  %195 = vmatpush2.msra.mxu0 0.0
  %196 = vmatprep.subr.mxu0 0.0
  %197 = vmatpush2.msra.mxu0 0.0
  %198 = vmatprep.subr.mxu0 0.0
  %199 = vmatpush2.msra.mxu0 0.0
  %200 = vmatprep.subr.mxu0 0.0
  %201 = vmatpush2.msra.mxu0 0.0
  %202 = vmatprep.subr.mxu0 0.0
  %203 = vmatpush2.msra.mxu0 0.0
  %204 = vmatprep.subr.mxu0 0.0
  %205 = vmatpush2.msra.mxu0 0.0
  %206 = vmatprep.subr.mxu0 0.0
  %207 = vmatpush2.msra.mxu0 0.0
  %208 = vmatprep.subr.mxu0 0.0
  %209 = vmatpush2.msra.mxu0 0.0
  %210 = vmatprep.subr.mxu0 0.0
  %211 = vmatpush2.msra.mxu0 0.0
  %212 = vmatprep.subr.mxu0 0.0
  %213 = vmatpush2.msra.mxu0 0.0
  %214 = vmatprep.subr.mxu0 0.0
  %215 = vmatpush2.msra.mxu0 0.0
  %216 = vmatprep.subr.mxu0 0.0
  %217 = vmatpush2.msra.mxu0 0.0
  %218 = vmatprep.subr.mxu0 0.0
  %219 = vmatpush2.msra.mxu0 0.0
  %220 = vmatprep.subr.mxu0 0.0
  %221 = vmatpush2.msra.mxu0 0.0
  %222 = vmatprep.mubr.f32.mxu0 0.0
  %223 = vmatmul.mubr.f32.gmra.mxu0 %v147
  %v224 = vpop.f32.mrf.mxu0
  %v225 = vadd.f32 0.0, %v224
  %v226 = vpop.f32.mrf.mxu0
  %227 = vmatprep.mubr.f32.mxu0 0.0
  %228 = vmatmul.mubr.f32.gmra.mxu0 %v150
  %v229 = vpop.f32.mrf.mxu0
  %v230 = vadd.f32 0.0, %v229
  %v231 = vpop.f32.mrf.mxu0
  %232 = vmatprep.mubr.f32.mxu0 0.0
  %233 = vmatmul.mubr.f32.gmra.mxu0 %v153
  %v234 = vpop.f32.mrf.mxu0
  %v235 = vadd.f32 0.0, %v234
  %v236 = vpop.f32.mrf.mxu0
  %237 = vmatprep.mubr.f32.mxu0 0.0
  %238 = vmatmul.mubr.f32.gmra.mxu0 %v156
  %v239 = vpop.f32.mrf.mxu0
  %v240 = vadd.f32 0.0, %v239
  %v241 = vpop.f32.mrf.mxu0
  %242 = vdwg.mxu0
  %v243 = vlaneseq
  %v244 = vshrl.u32 %v243, 7
  %v245 = vsub.s32 1, %v244
  %v246 = vrot.slane %v21, %v245
  %248 = vrot.lane.b32.xlu0 %v246, 32
  %v249 = vpop.permute.xlu0 %248
  %v251 = vadd.f32 %v225, %v249
  %v252 = vadd.f32 %v230, %v249
  %v253 = vadd.f32 %v235, %v249
  %v254 = vadd.f32 %v240, %v249
  %v256 = vsel %vm145, %v144, 0
  %258 = vmatprep.subr.mxu0 0.0
  %259 = vmatpush1.xpose.msra.mxu0 0.0
  %260 = vmatprep.subr.mxu0 0.0
  %261 = vmatpush1.xpose.msra.mxu0 0.0
  %262 = vmatprep.subr.mxu0 0.0
  %263 = vmatpush1.xpose.msra.mxu0 0.0
  %264 = vmatprep.subr.mxu0 0.0
  %265 = vmatpush1.xpose.msra.mxu0 0.0
  %266 = vmatprep.subr.mxu0 0.0
  %267 = vmatpush1.xpose.msra.mxu0 0.0
  %268 = vmatprep.subr.mxu0 0.0
  %269 = vmatpush1.xpose.msra.mxu0 0.0
  %270 = vmatprep.subr.mxu0 0.0
  %271 = vmatpush1.xpose.msra.mxu0 0.0
  %272 = vmatprep.subr.mxu0 0.0
  %273 = vmatpush1.xpose.msra.mxu0 0.0
  %274 = vmatprep.subr.mxu0 0.0
  %275 = vmatpush1.xpose.msra.mxu0 0.0
  %276 = vmatprep.subr.mxu0 0.0
  %277 = vmatpush1.xpose.msra.mxu0 0.0
  %278 = vmatprep.subr.mxu0 0.0
  %279 = vmatpush1.xpose.msra.mxu0 0.0
  %280 = vmatprep.subr.mxu0 0.0
  %281 = vmatpush1.xpose.msra.mxu0 0.0
  %282 = vmatprep.subr.mxu0 0.0
  %283 = vmatpush1.xpose.msra.mxu0 %v156
  %284 = vmatprep.subr.mxu0 0.0
  %285 = vmatpush1.xpose.msra.mxu0 %v153
  %286 = vmatprep.subr.mxu0 0.0
  %287 = vmatpush1.xpose.msra.mxu0 %v150
  %288 = vmatprep.subr.mxu0 0.0
  %289 = vmatpush1.xpose.msra.mxu0 %v147
  %290 = vmatprep.subr.mxu0 0.0
  %291 = vmatpush2.xpose.msra.mxu0 0.0
  %292 = vmatprep.subr.mxu0 0.0
  %293 = vmatpush2.xpose.msra.mxu0 0.0
  %294 = vmatprep.subr.mxu0 0.0
  %295 = vmatpush2.xpose.msra.mxu0 0.0
  %296 = vmatprep.subr.mxu0 0.0
  %297 = vmatpush2.xpose.msra.mxu0 0.0
  %298 = vmatprep.subr.mxu0 0.0
  %299 = vmatpush2.xpose.msra.mxu0 0.0
  %300 = vmatprep.subr.mxu0 0.0
  %301 = vmatpush2.xpose.msra.mxu0 0.0
  %302 = vmatprep.subr.mxu0 0.0
  %303 = vmatpush2.xpose.msra.mxu0 0.0
  %304 = vmatprep.subr.mxu0 0.0
  %305 = vmatpush2.xpose.msra.mxu0 0.0
  %306 = vmatprep.subr.mxu0 0.0
  %307 = vmatpush2.xpose.msra.mxu0 0.0
  %308 = vmatprep.subr.mxu0 0.0
  %309 = vmatpush2.xpose.msra.mxu0 0.0
  %310 = vmatprep.subr.mxu0 0.0
  %311 = vmatpush2.xpose.msra.mxu0 0.0
  %312 = vmatprep.subr.mxu0 0.0
  %313 = vmatpush2.xpose.msra.mxu0 0.0
  %314 = vmatprep.subr.mxu0 0.0
  %315 = vmatpush2.xpose.msra.mxu0 0.0
  %316 = vmatprep.subr.mxu0 0.0
  %317 = vmatpush2.xpose.msra.mxu0 0.0
  %318 = vmatprep.subr.mxu0 0.0
  %319 = vmatpush2.xpose.msra.mxu0 0.0
  %320 = vmatprep.subr.mxu0 0.0
  %321 = vmatpush2.xpose.msra.mxu0 0.0
  %322 = vmatprep.mubr.f32.mxu0 0.0
  %323 = vmatmul.mubr.f32.gmra.mxu0 %v256
  %v324 = vpop.f32.mrf.mxu0
  %v325 = vadd.f32 0.0, %v324
  %v326 = vpop.f32.mrf.mxu0
  %327 = vdwg.mxu0
  %v329 = vrot.slane %v325, 1
  %330 = vrot.lane.b32.xlu0 %v329, 32
  %v331 = vpop.permute.xlu0 %330
  %v333 = vsel %vm22, %v325, %v331
  %v334 = vlaneseq
  %v335 = vshrl.u32 %v334, 7
  %v336 = vsub.s32 0, %v335
  %v337 = vrot.slane %v333, %v336
  %342 = vrot.lane.b32.xlu0 %v225, 64
  %v343 = vpop.permute.xlu0 %342
  %344 = vrot.lane.b32.xlu0 %v230, 64
  %v345 = vpop.permute.xlu0 %344
  %346 = vrot.lane.b32.xlu0 %v235, 64
  %v347 = vpop.permute.xlu0 %346
  %348 = vrot.lane.b32.xlu0 %v240, 64
  %v349 = vpop.permute.xlu0 %348
  %v354 = vadd.f32 %v337, %v343
  %v355 = vadd.f32 %v337, %v345
  %v356 = vadd.f32 %v337, %v347
  %v357 = vadd.f32 %v337, %v349
  %v358 = vld [vmem:[%s2] sm:$0xff]
  %v359 = vld [vmem:[%s2 + $0x8] sm:$0xff]
  %v360 = vld [vmem:[%s2 + $0x10] sm:$0xff]
  %v361 = vld [vmem:[%s2 + $0x18] sm:$0xff]
  %v362 = vadd.f32 %v354, %v358
  %v363 = vadd.f32 %v355, %v359
  %v364 = vadd.f32 %v356, %v360
  %v365 = vadd.f32 %v357, %v361
  %vm366 = vcmp.ge.f32.partialorder %v362, 0.0
  %vm367 = vcmp.ge.f32.partialorder %v363, 0.0
  %vm368 = vcmp.ge.f32.partialorder %v364, 0.0
  %vm369 = vcmp.ge.f32.partialorder %v365, 0.0
  %v370 = vmul.f32 %v362, 0.2
  %v371 = vmul.f32 %v363, 0.2
  %v372 = vmul.f32 %v364, 0.2
  %v373 = vmul.f32 %v365, 0.2
  %v374 = vsel %vm366, %v362, %v370
  %v375 = vsel %vm367, %v363, %v371
  %v376 = vsel %vm368, %v364, %v372
  %v377 = vsel %vm369, %v365, %v373
  %v378 = vmul.f32 %v374, %v17
  %v379 = vmul.f32 %v375, %v18
  %v380 = vmul.f32 %v376, %v19
  %v381 = vmul.f32 %v377, %v20
  %382 = vst.msk [vmem:[#allocation2] sm:$0xff] %vm145, %v225
  %383 = vst.msk [vmem:[#allocation2 + $0x8] sm:$0xff] %vm145, %v230
  %384 = vst.msk [vmem:[#allocation2 + $0x10] sm:$0xff] %vm145, %v235
  %385 = vst.msk [vmem:[#allocation2 + $0x18] sm:$0xff] %vm145, %v240
  %vm386 = vcmask 261248
  %387 = vst.msk [vmem:[#allocation2 + $0x20] sm:$0xff] %vm386, %v225
  %388 = vst.msk [vmem:[#allocation2 + $0x28] sm:$0xff] %vm386, %v230
  %389 = vst.msk [vmem:[#allocation2 + $0x30] sm:$0xff] %vm386, %v235
  %390 = vst.msk [vmem:[#allocation2 + $0x38] sm:$0xff] %vm386, %v240
  %v391 = vld [vmem:[#allocation2] sm:$0xff]
  %v392 = vld [vmem:[#allocation2 + $0x8] sm:$0xff]
  %v393 = vld [vmem:[#allocation2 + $0x10] sm:$0xff]
  %v394 = vld [vmem:[#allocation2 + $0x18] sm:$0xff]
  %v395 = vld [vmem:[#allocation2 + $0x20] sm:$0xff]
  %v396 = vld [vmem:[#allocation2 + $0x28] sm:$0xff]
  %v397 = vld [vmem:[#allocation2 + $0x30] sm:$0xff]
  %v398 = vld [vmem:[#allocation2 + $0x38] sm:$0xff]
  %403 = vrot.lane.b32.xlu0 %v251, 96
  %v404 = vpop.permute.xlu0 %403
  %405 = vrot.lane.b32.xlu0 %v252, 96
  %v406 = vpop.permute.xlu0 %405
  %407 = vrot.lane.b32.xlu0 %v253, 96
  %v408 = vpop.permute.xlu0 %407
  %409 = vrot.lane.b32.xlu0 %v254, 96
  %v410 = vpop.permute.xlu0 %409
  %vm415 = vcmask 523264
  %v417 = vsel %vm415, %v378, 0
  %v420 = vsel %vm415, %v379, 0
  %v423 = vsel %vm415, %v380, 0
  %v426 = vsel %vm415, %v381, 0
  %428 = vmatprep.subr.mxu0 0.0
  %429 = vmatpush1.msra.mxu0 0.0
  %430 = vmatprep.subr.mxu0 0.0
  %431 = vmatpush1.msra.mxu0 0.0
  %432 = vmatprep.subr.mxu0 0.0
  %433 = vmatpush1.msra.mxu0 0.0
  %434 = vmatprep.subr.mxu0 0.0
  %435 = vmatpush1.msra.mxu0 0.0
  %436 = vmatprep.subr.mxu0 0.0
  %437 = vmatpush1.msra.mxu0 0.0
  %438 = vmatprep.subr.mxu0 0.0
  %439 = vmatpush1.msra.mxu0 0.0
  %440 = vmatprep.subr.mxu0 0.0
  %441 = vmatpush1.msra.mxu0 0.0
  %442 = vmatprep.subr.mxu0 0.0
  %443 = vmatpush1.msra.mxu0 0.0
  %444 = vmatprep.subr.mxu0 0.0
  %445 = vmatpush1.msra.mxu0 %v398
  %446 = vmatprep.subr.mxu0 0.0
  %447 = vmatpush1.msra.mxu0 %v397
  %448 = vmatprep.subr.mxu0 0.0
  %449 = vmatpush1.msra.mxu0 %v396
  %450 = vmatprep.subr.mxu0 0.0
  %451 = vmatpush1.msra.mxu0 %v395
  %452 = vmatprep.subr.mxu0 0.0
  %453 = vmatpush1.msra.mxu0 %v394
  %454 = vmatprep.subr.mxu0 0.0
  %455 = vmatpush1.msra.mxu0 %v393
  %456 = vmatprep.subr.mxu0 0.0
  %457 = vmatpush1.msra.mxu0 %v392
  %458 = vmatprep.subr.mxu0 0.0
  %459 = vmatpush1.msra.mxu0 %v391
  %460 = vmatprep.subr.mxu0 0.0
  %461 = vmatpush2.msra.mxu0 0.0
  %462 = vmatprep.subr.mxu0 0.0
  %463 = vmatpush2.msra.mxu0 0.0
  %464 = vmatprep.subr.mxu0 0.0
  %465 = vmatpush2.msra.mxu0 0.0
  %466 = vmatprep.subr.mxu0 0.0
  %467 = vmatpush2.msra.mxu0 0.0
  %468 = vmatprep.subr.mxu0 0.0
  %469 = vmatpush2.msra.mxu0 0.0
  %470 = vmatprep.subr.mxu0 0.0
  %471 = vmatpush2.msra.mxu0 0.0
  %472 = vmatprep.subr.mxu0 0.0
  %473 = vmatpush2.msra.mxu0 0.0
  %474 = vmatprep.subr.mxu0 0.0
  %475 = vmatpush2.msra.mxu0 0.0
  %476 = vmatprep.subr.mxu0 0.0
  %477 = vmatpush2.msra.mxu0 0.0
  %478 = vmatprep.subr.mxu0 0.0
  %479 = vmatpush2.msra.mxu0 0.0
  %480 = vmatprep.subr.mxu0 0.0
  %481 = vmatpush2.msra.mxu0 0.0
  %482 = vmatprep.subr.mxu0 0.0
  %483 = vmatpush2.msra.mxu0 0.0
  %484 = vmatprep.subr.mxu0 0.0
  %485 = vmatpush2.msra.mxu0 0.0
  %486 = vmatprep.subr.mxu0 0.0
  %487 = vmatpush2.msra.mxu0 0.0
  %488 = vmatprep.subr.mxu0 0.0
  %489 = vmatpush2.msra.mxu0 0.0
  %490 = vmatprep.subr.mxu0 0.0
  %491 = vmatpush2.msra.mxu0 0.0
  %492 = vmatprep.mubr.f32.mxu0 0.0
  %493 = vmatmul.mubr.f32.gmra.mxu0 %v417
  %v494 = vpop.f32.mrf.mxu0
  %v495 = vadd.f32 %v404, %v494
  %v496 = vpop.f32.mrf.mxu0
  %497 = vmatprep.mubr.f32.mxu0 0.0
  %498 = vmatmul.mubr.f32.gmra.mxu0 %v420
  %v499 = vpop.f32.mrf.mxu0
  %v500 = vadd.f32 %v406, %v499
  %v501 = vpop.f32.mrf.mxu0
  %502 = vmatprep.mubr.f32.mxu0 0.0
  %503 = vmatmul.mubr.f32.gmra.mxu0 %v423
  %v504 = vpop.f32.mrf.mxu0
  %v505 = vadd.f32 %v408, %v504
  %v506 = vpop.f32.mrf.mxu0
  %507 = vmatprep.mubr.f32.mxu0 0.0
  %508 = vmatmul.mubr.f32.gmra.mxu0 %v426
  %v509 = vpop.f32.mrf.mxu0
  %v510 = vadd.f32 %v410, %v509
  %v511 = vpop.f32.mrf.mxu0
  %512 = vdwg.mxu0
  %v513 = vsel %vm22, %v495, 0.0
  %v514 = vsel %vm22, %v500, 0.0
  %v515 = vadd.f32 %v513, %v514
  %v516 = vsel %vm22, %v505, 0.0
  %v517 = vadd.f32 %v515, %v516
  %v518 = vsel %vm22, %v510, 0.0
  %v519 = vadd.f32 %v517, %v518
  %v520 = vrot.slane %v519, 4
  %v521 = vadd.f32 %v519, %v520
  %v522 = vrot.slane %v521, 2
  %v523 = vadd.f32 %v521, %v522
  %v524 = vrot.slane %v523, 1
  %v525 = vadd.f32 %v523, %v524
  %v526 = vrcp.pop 32.0
  %v527 = vmul.f32 %v525, %v526
  %v528 = vsub.f32 %v495, %v527
  %v529 = vsub.f32 %v500, %v527
  %v530 = vsub.f32 %v505, %v527
  %v531 = vsub.f32 %v510, %v527
  %v532 = vmul.f32 %v528, %v528
  %v533 = vmul.f32 %v529, %v529
  %v534 = vmul.f32 %v530, %v530
  %v535 = vmul.f32 %v531, %v531
  %v536 = vsel %vm22, %v532, 0.0
  %v537 = vsel %vm22, %v533, 0.0
  %v538 = vadd.f32 %v536, %v537
  %v539 = vsel %vm22, %v534, 0.0
  %v540 = vadd.f32 %v538, %v539
  %v541 = vsel %vm22, %v535, 0.0
  %v542 = vadd.f32 %v540, %v541
  %v543 = vrot.slane %v542, 4
  %v544 = vadd.f32 %v542, %v543
  %v545 = vrot.slane %v544, 2
  %v546 = vadd.f32 %v544, %v545
  %v547 = vrot.slane %v546, 1
  %v548 = vadd.f32 %v546, %v547
  %v549 = vmul.f32 %v548, %v526
  %v550 = vadd.f32 %v549, 1e-05
  %v551 = vrsqrt.pop %v550
  %v552 = vmul.f32 %v528, %v551
  %v553 = vmul.f32 %v529, %v551
  %v554 = vmul.f32 %v530, %v551
  %v555 = vmul.f32 %v531, %v551
  %v556 = vlaneseq
  %v557 = vshrl.u32 %v556, 7
  %v558 = vsub.s32 2, %v557
  %v559 = vrot.slane %v21, %v558
  %v560 = vmul.f32 %v552, %v559
  %v561 = vmul.f32 %v553, %v559
  %v562 = vmul.f32 %v554, %v559
  %v563 = vmul.f32 %v555, %v559
  %v564 = vlaneseq
  %v565 = vshrl.u32 %v564, 7
  %v566 = vsub.s32 3, %v565
  %v567 = vrot.slane %v21, %v566
  %v568 = vadd.f32 %v560, %v567
  %v569 = vadd.f32 %v561, %v567
  %v570 = vadd.f32 %v562, %v567
  %v571 = vadd.f32 %v563, %v567
  %v572 = vmax.f32 %v568, 0.0
  %v573 = vmax.f32 %v569, 0.0
  %v574 = vmax.f32 %v570, 0.0
  %v575 = vmax.f32 %v571, 0.0
  %v576 = vld [vmem:[%s3 + $0x20] sm:$0xff]
  %v577 = vld [vmem:[%s3 + $0x28] sm:$0xff]
  %v578 = vld [vmem:[%s3 + $0x30] sm:$0xff]
  %v579 = vld [vmem:[%s3 + $0x38] sm:$0xff]
  %v580 = vld [vmem:[%s3 + $0x40] sm:$0x3]
  %v582 = vsel %vm22, %v572, 0
  %v585 = vsel %vm22, %v573, 0
  %v588 = vsel %vm22, %v574, 0
  %v591 = vsel %vm22, %v575, 0
  %593 = vmatprep.subr.mxu0 0.0
  %594 = vmatpush1.msra.mxu0 0.0
  %595 = vmatprep.subr.mxu0 0.0
  %596 = vmatpush1.msra.mxu0 0.0
  %597 = vmatprep.subr.mxu0 0.0
  %598 = vmatpush1.msra.mxu0 0.0
  %599 = vmatprep.subr.mxu0 0.0
  %600 = vmatpush1.msra.mxu0 0.0
  %601 = vmatprep.subr.mxu0 0.0
  %602 = vmatpush1.msra.mxu0 0.0
  %603 = vmatprep.subr.mxu0 0.0
  %604 = vmatpush1.msra.mxu0 0.0
  %605 = vmatprep.subr.mxu0 0.0
  %606 = vmatpush1.msra.mxu0 0.0
  %607 = vmatprep.subr.mxu0 0.0
  %608 = vmatpush1.msra.mxu0 0.0
  %609 = vmatprep.subr.mxu0 0.0
  %610 = vmatpush1.msra.mxu0 0.0
  %611 = vmatprep.subr.mxu0 0.0
  %612 = vmatpush1.msra.mxu0 0.0
  %613 = vmatprep.subr.mxu0 0.0
  %614 = vmatpush1.msra.mxu0 0.0
  %615 = vmatprep.subr.mxu0 0.0
  %616 = vmatpush1.msra.mxu0 0.0
  %617 = vmatprep.subr.mxu0 0.0
  %618 = vmatpush1.msra.mxu0 %v579
  %619 = vmatprep.subr.mxu0 0.0
  %620 = vmatpush1.msra.mxu0 %v578
  %621 = vmatprep.subr.mxu0 0.0
  %622 = vmatpush1.msra.mxu0 %v577
  %623 = vmatprep.subr.mxu0 0.0
  %624 = vmatpush1.msra.mxu0 %v576
  %625 = vmatprep.subr.mxu0 0.0
  %626 = vmatpush2.msra.mxu0 0.0
  %627 = vmatprep.subr.mxu0 0.0
  %628 = vmatpush2.msra.mxu0 0.0
  %629 = vmatprep.subr.mxu0 0.0
  %630 = vmatpush2.msra.mxu0 0.0
  %631 = vmatprep.subr.mxu0 0.0
  %632 = vmatpush2.msra.mxu0 0.0
  %633 = vmatprep.subr.mxu0 0.0
  %634 = vmatpush2.msra.mxu0 0.0
  %635 = vmatprep.subr.mxu0 0.0
  %636 = vmatpush2.msra.mxu0 0.0
  %637 = vmatprep.subr.mxu0 0.0
  %638 = vmatpush2.msra.mxu0 0.0
  %639 = vmatprep.subr.mxu0 0.0
  %640 = vmatpush2.msra.mxu0 0.0
  %641 = vmatprep.subr.mxu0 0.0
  %642 = vmatpush2.msra.mxu0 0.0
  %643 = vmatprep.subr.mxu0 0.0
  %644 = vmatpush2.msra.mxu0 0.0
  %645 = vmatprep.subr.mxu0 0.0
  %646 = vmatpush2.msra.mxu0 0.0
  %647 = vmatprep.subr.mxu0 0.0
  %648 = vmatpush2.msra.mxu0 0.0
  %649 = vmatprep.subr.mxu0 0.0
  %650 = vmatpush2.msra.mxu0 0.0
  %651 = vmatprep.subr.mxu0 0.0
  %652 = vmatpush2.msra.mxu0 0.0
  %653 = vmatprep.subr.mxu0 0.0
  %654 = vmatpush2.msra.mxu0 0.0
  %655 = vmatprep.subr.mxu0 0.0
  %656 = vmatpush2.msra.mxu0 0.0
  %657 = vmatprep.mubr.f32.mxu0 0.0
  %658 = vmatmul.mubr.f32.gmra.mxu0 %v582
  %v659 = vpop.f32.mrf.mxu0
  %v660 = vadd.f32 0.0, %v659
  %v661 = vpop.f32.mrf.mxu0
  %662 = vmatprep.mubr.f32.mxu0 0.0
  %663 = vmatmul.mubr.f32.gmra.mxu0 %v585
  %v664 = vpop.f32.mrf.mxu0
  %v665 = vadd.f32 0.0, %v664
  %v666 = vpop.f32.mrf.mxu0
  %667 = vmatprep.mubr.f32.mxu0 0.0
  %668 = vmatmul.mubr.f32.gmra.mxu0 %v588
  %v669 = vpop.f32.mrf.mxu0
  %v670 = vadd.f32 0.0, %v669
  %v671 = vpop.f32.mrf.mxu0
  %672 = vmatprep.mubr.f32.mxu0 0.0
  %673 = vmatmul.mubr.f32.gmra.mxu0 %v591
  %v674 = vpop.f32.mrf.mxu0
  %v675 = vadd.f32 0.0, %v674
  %v676 = vpop.f32.mrf.mxu0
  %677 = vdwg.mxu0
  %v678 = vlaneseq
  %v679 = vshrl.u32 %v678, 7
  %v680 = vsub.s32 4, %v679
  %v681 = vrot.slane %v21, %v680
  %683 = vrot.lane.b32.xlu0 %v681, 32
  %v684 = vpop.permute.xlu0 %683
  %v686 = vadd.f32 %v660, %v684
  %v687 = vadd.f32 %v665, %v684
  %v688 = vadd.f32 %v670, %v684
  %v689 = vadd.f32 %v675, %v684
  %v691 = vsel %vm22, %v580, 0
  %693 = vmatprep.subr.mxu0 0.0
  %694 = vmatpush1.xpose.msra.mxu0 0.0
  %695 = vmatprep.subr.mxu0 0.0
  %696 = vmatpush1.xpose.msra.mxu0 0.0
  %697 = vmatprep.subr.mxu0 0.0
  %698 = vmatpush1.xpose.msra.mxu0 0.0
  %699 = vmatprep.subr.mxu0 0.0
  %700 = vmatpush1.xpose.msra.mxu0 0.0
  %701 = vmatprep.subr.mxu0 0.0
  %702 = vmatpush1.xpose.msra.mxu0 0.0
  %703 = vmatprep.subr.mxu0 0.0
  %704 = vmatpush1.xpose.msra.mxu0 0.0
  %705 = vmatprep.subr.mxu0 0.0
  %706 = vmatpush1.xpose.msra.mxu0 0.0
  %707 = vmatprep.subr.mxu0 0.0
  %708 = vmatpush1.xpose.msra.mxu0 0.0
  %709 = vmatprep.subr.mxu0 0.0
  %710 = vmatpush1.xpose.msra.mxu0 0.0
  %711 = vmatprep.subr.mxu0 0.0
  %712 = vmatpush1.xpose.msra.mxu0 0.0
  %713 = vmatprep.subr.mxu0 0.0
  %714 = vmatpush1.xpose.msra.mxu0 0.0
  %715 = vmatprep.subr.mxu0 0.0
  %716 = vmatpush1.xpose.msra.mxu0 0.0
  %717 = vmatprep.subr.mxu0 0.0
  %718 = vmatpush1.xpose.msra.mxu0 %v591
  %719 = vmatprep.subr.mxu0 0.0
  %720 = vmatpush1.xpose.msra.mxu0 %v588
  %721 = vmatprep.subr.mxu0 0.0
  %722 = vmatpush1.xpose.msra.mxu0 %v585
  %723 = vmatprep.subr.mxu0 0.0
  %724 = vmatpush1.xpose.msra.mxu0 %v582
  %725 = vmatprep.subr.mxu0 0.0
  %726 = vmatpush2.xpose.msra.mxu0 0.0
  %727 = vmatprep.subr.mxu0 0.0
  %728 = vmatpush2.xpose.msra.mxu0 0.0
  %729 = vmatprep.subr.mxu0 0.0
  %730 = vmatpush2.xpose.msra.mxu0 0.0
  %731 = vmatprep.subr.mxu0 0.0
  %732 = vmatpush2.xpose.msra.mxu0 0.0
  %733 = vmatprep.subr.mxu0 0.0
  %734 = vmatpush2.xpose.msra.mxu0 0.0
  %735 = vmatprep.subr.mxu0 0.0
  %736 = vmatpush2.xpose.msra.mxu0 0.0
  %737 = vmatprep.subr.mxu0 0.0
  %738 = vmatpush2.xpose.msra.mxu0 0.0
  %739 = vmatprep.subr.mxu0 0.0
  %740 = vmatpush2.xpose.msra.mxu0 0.0
  %741 = vmatprep.subr.mxu0 0.0
  %742 = vmatpush2.xpose.msra.mxu0 0.0
  %743 = vmatprep.subr.mxu0 0.0
  %744 = vmatpush2.xpose.msra.mxu0 0.0
  %745 = vmatprep.subr.mxu0 0.0
  %746 = vmatpush2.xpose.msra.mxu0 0.0
  %747 = vmatprep.subr.mxu0 0.0
  %748 = vmatpush2.xpose.msra.mxu0 0.0
  %749 = vmatprep.subr.mxu0 0.0
  %750 = vmatpush2.xpose.msra.mxu0 0.0
  %751 = vmatprep.subr.mxu0 0.0
  %752 = vmatpush2.xpose.msra.mxu0 0.0
  %753 = vmatprep.subr.mxu0 0.0
  %754 = vmatpush2.xpose.msra.mxu0 0.0
  %755 = vmatprep.subr.mxu0 0.0
  %756 = vmatpush2.xpose.msra.mxu0 0.0
  %757 = vmatprep.mubr.f32.mxu0 0.0
  %758 = vmatmul.mubr.f32.gmra.mxu0 %v691
  %v759 = vpop.f32.mrf.mxu0
  %v760 = vadd.f32 0.0, %v759
  %v761 = vpop.f32.mrf.mxu0
  %762 = vdwg.mxu0
  %v764 = vrot.slane %v760, 1
  %765 = vrot.lane.b32.xlu0 %v764, 32
  %v766 = vpop.permute.xlu0 %765
  %v768 = vsel %vm22, %v760, %v766
  %v769 = vlaneseq
  %v770 = vshrl.u32 %v769, 7
  %v771 = vsub.s32 0, %v770
  %v772 = vrot.slane %v768, %v771
  %777 = vrot.lane.b32.xlu0 %v660, 64
  %v778 = vpop.permute.xlu0 %777
  %779 = vrot.lane.b32.xlu0 %v665, 64
  %v780 = vpop.permute.xlu0 %779
  %781 = vrot.lane.b32.xlu0 %v670, 64
  %v782 = vpop.permute.xlu0 %781
  %783 = vrot.lane.b32.xlu0 %v675, 64
  %v784 = vpop.permute.xlu0 %783
  %v789 = vadd.f32 %v772, %v778
  %v790 = vadd.f32 %v772, %v780
  %v791 = vadd.f32 %v772, %v782
  %v792 = vadd.f32 %v772, %v784
  %v793 = vld [vmem:[%s2 + $0x20] sm:$0xff]
  %v794 = vld [vmem:[%s2 + $0x28] sm:$0xff]
  %v795 = vld [vmem:[%s2 + $0x30] sm:$0xff]
  %v796 = vld [vmem:[%s2 + $0x38] sm:$0xff]
  %v797 = vadd.f32 %v789, %v793
  %v798 = vadd.f32 %v790, %v794
  %v799 = vadd.f32 %v791, %v795
  %v800 = vadd.f32 %v792, %v796
  %vm801 = vcmp.ge.f32.partialorder %v797, 0.0
  %vm802 = vcmp.ge.f32.partialorder %v798, 0.0
  %vm803 = vcmp.ge.f32.partialorder %v799, 0.0
  %vm804 = vcmp.ge.f32.partialorder %v800, 0.0
  %v805 = vmul.f32 %v797, 0.2
  %v806 = vmul.f32 %v798, 0.2
  %v807 = vmul.f32 %v799, 0.2
  %v808 = vmul.f32 %v800, 0.2
  %v809 = vsel %vm801, %v797, %v805
  %v810 = vsel %vm802, %v798, %v806
  %v811 = vsel %vm803, %v799, %v807
  %v812 = vsel %vm804, %v800, %v808
  %v813 = vmul.f32 %v809, %v17
  %v814 = vmul.f32 %v810, %v18
  %v815 = vmul.f32 %v811, %v19
  %v816 = vmul.f32 %v812, %v20
  %817 = vst.msk [vmem:[#allocation2] sm:$0xff] %vm145, %v660
  %818 = vst.msk [vmem:[#allocation2 + $0x8] sm:$0xff] %vm145, %v665
  %819 = vst.msk [vmem:[#allocation2 + $0x10] sm:$0xff] %vm145, %v670
  %820 = vst.msk [vmem:[#allocation2 + $0x18] sm:$0xff] %vm145, %v675
  %821 = vst.msk [vmem:[#allocation2 + $0x20] sm:$0xff] %vm386, %v660
  %822 = vst.msk [vmem:[#allocation2 + $0x28] sm:$0xff] %vm386, %v665
  %823 = vst.msk [vmem:[#allocation2 + $0x30] sm:$0xff] %vm386, %v670
  %824 = vst.msk [vmem:[#allocation2 + $0x38] sm:$0xff] %vm386, %v675
  %v825 = vld [vmem:[#allocation2] sm:$0xff]
  %v826 = vld [vmem:[#allocation2 + $0x8] sm:$0xff]
  %v827 = vld [vmem:[#allocation2 + $0x10] sm:$0xff]
  %v828 = vld [vmem:[#allocation2 + $0x18] sm:$0xff]
  %v829 = vld [vmem:[#allocation2 + $0x20] sm:$0xff]
  %v830 = vld [vmem:[#allocation2 + $0x28] sm:$0xff]
  %v831 = vld [vmem:[#allocation2 + $0x30] sm:$0xff]
  %v832 = vld [vmem:[#allocation2 + $0x38] sm:$0xff]
  %837 = vrot.lane.b32.xlu0 %v686, 96
  %v838 = vpop.permute.xlu0 %837
  %839 = vrot.lane.b32.xlu0 %v687, 96
  %v840 = vpop.permute.xlu0 %839
  %841 = vrot.lane.b32.xlu0 %v688, 96
  %v842 = vpop.permute.xlu0 %841
  %843 = vrot.lane.b32.xlu0 %v689, 96
  %v844 = vpop.permute.xlu0 %843
  %v850 = vsel %vm415, %v813, 0
  %v853 = vsel %vm415, %v814, 0
  %v856 = vsel %vm415, %v815, 0
  %v859 = vsel %vm415, %v816, 0
  %861 = vmatprep.subr.mxu0 0.0
  %862 = vmatpush1.msra.mxu0 0.0
  %863 = vmatprep.subr.mxu0 0.0
  %864 = vmatpush1.msra.mxu0 0.0
  %865 = vmatprep.subr.mxu0 0.0
  %866 = vmatpush1.msra.mxu0 0.0
  %867 = vmatprep.subr.mxu0 0.0
  %868 = vmatpush1.msra.mxu0 0.0
  %869 = vmatprep.subr.mxu0 0.0
  %870 = vmatpush1.msra.mxu0 0.0
  %871 = vmatprep.subr.mxu0 0.0
  %872 = vmatpush1.msra.mxu0 0.0
  %873 = vmatprep.subr.mxu0 0.0
  %874 = vmatpush1.msra.mxu0 0.0
  %875 = vmatprep.subr.mxu0 0.0
  %876 = vmatpush1.msra.mxu0 0.0
  %877 = vmatprep.subr.mxu0 0.0
  %878 = vmatpush1.msra.mxu0 %v832
  %879 = vmatprep.subr.mxu0 0.0
  %880 = vmatpush1.msra.mxu0 %v831
  %881 = vmatprep.subr.mxu0 0.0
  %882 = vmatpush1.msra.mxu0 %v830
  %883 = vmatprep.subr.mxu0 0.0
  %884 = vmatpush1.msra.mxu0 %v829
  %885 = vmatprep.subr.mxu0 0.0
  %886 = vmatpush1.msra.mxu0 %v828
  %887 = vmatprep.subr.mxu0 0.0
  %888 = vmatpush1.msra.mxu0 %v827
  %889 = vmatprep.subr.mxu0 0.0
  %890 = vmatpush1.msra.mxu0 %v826
  %891 = vmatprep.subr.mxu0 0.0
  %892 = vmatpush1.msra.mxu0 %v825
  %893 = vmatprep.subr.mxu0 0.0
  %894 = vmatpush2.msra.mxu0 0.0
  %895 = vmatprep.subr.mxu0 0.0
  %896 = vmatpush2.msra.mxu0 0.0
  %897 = vmatprep.subr.mxu0 0.0
  %898 = vmatpush2.msra.mxu0 0.0
  %899 = vmatprep.subr.mxu0 0.0
  %900 = vmatpush2.msra.mxu0 0.0
  %901 = vmatprep.subr.mxu0 0.0
  %902 = vmatpush2.msra.mxu0 0.0
  %903 = vmatprep.subr.mxu0 0.0
  %904 = vmatpush2.msra.mxu0 0.0
  %905 = vmatprep.subr.mxu0 0.0
  %906 = vmatpush2.msra.mxu0 0.0
  %907 = vmatprep.subr.mxu0 0.0
  %908 = vmatpush2.msra.mxu0 0.0
  %909 = vmatprep.subr.mxu0 0.0
  %910 = vmatpush2.msra.mxu0 0.0
  %911 = vmatprep.subr.mxu0 0.0
  %912 = vmatpush2.msra.mxu0 0.0
  %913 = vmatprep.subr.mxu0 0.0
  %914 = vmatpush2.msra.mxu0 0.0
  %915 = vmatprep.subr.mxu0 0.0
  %916 = vmatpush2.msra.mxu0 0.0
  %917 = vmatprep.subr.mxu0 0.0
  %918 = vmatpush2.msra.mxu0 0.0
  %919 = vmatprep.subr.mxu0 0.0
  %920 = vmatpush2.msra.mxu0 0.0
  %921 = vmatprep.subr.mxu0 0.0
  %922 = vmatpush2.msra.mxu0 0.0
  %923 = vmatprep.subr.mxu0 0.0
  %924 = vmatpush2.msra.mxu0 0.0
  %925 = vmatprep.mubr.f32.mxu0 0.0
  %926 = vmatmul.mubr.f32.gmra.mxu0 %v850
  %v927 = vpop.f32.mrf.mxu0
  %v928 = vadd.f32 %v838, %v927
  %v929 = vpop.f32.mrf.mxu0
  %930 = vmatprep.mubr.f32.mxu0 0.0
  %931 = vmatmul.mubr.f32.gmra.mxu0 %v853
  %v932 = vpop.f32.mrf.mxu0
  %v933 = vadd.f32 %v840, %v932
  %v934 = vpop.f32.mrf.mxu0
  %935 = vmatprep.mubr.f32.mxu0 0.0
  %936 = vmatmul.mubr.f32.gmra.mxu0 %v856
  %v937 = vpop.f32.mrf.mxu0
  %v938 = vadd.f32 %v842, %v937
  %v939 = vpop.f32.mrf.mxu0
  %940 = vmatprep.mubr.f32.mxu0 0.0
  %941 = vmatmul.mubr.f32.gmra.mxu0 %v859
  %v942 = vpop.f32.mrf.mxu0
  %v943 = vadd.f32 %v844, %v942
  %v944 = vpop.f32.mrf.mxu0
  %945 = vdwg.mxu0
  %v946 = vadd.f32 %v928, %v495
  %v947 = vadd.f32 %v933, %v500
  %v948 = vadd.f32 %v938, %v505
  %v949 = vadd.f32 %v943, %v510
  %v950 = vsel %vm22, %v946, 0.0
  %v951 = vsel %vm22, %v947, 0.0
  %v952 = vadd.f32 %v950, %v951
  %v953 = vsel %vm22, %v948, 0.0
  %v954 = vadd.f32 %v952, %v953
  %v955 = vsel %vm22, %v949, 0.0
  %v956 = vadd.f32 %v954, %v955
  %v957 = vrot.slane %v956, 4
  %v958 = vadd.f32 %v956, %v957
  %v959 = vrot.slane %v958, 2
  %v960 = vadd.f32 %v958, %v959
  %v961 = vrot.slane %v960, 1
  %v962 = vadd.f32 %v960, %v961
  %v963 = vmul.f32 %v962, %v526
  %v964 = vsub.f32 %v946, %v963
  %v965 = vsub.f32 %v947, %v963
  %v966 = vsub.f32 %v948, %v963
  %v967 = vsub.f32 %v949, %v963
  %v968 = vmul.f32 %v964, %v964
  %v969 = vmul.f32 %v965, %v965
  %v970 = vmul.f32 %v966, %v966
  %v971 = vmul.f32 %v967, %v967
  %v972 = vsel %vm22, %v968, 0.0
  %v973 = vsel %vm22, %v969, 0.0
  %v974 = vadd.f32 %v972, %v973
  %v975 = vsel %vm22, %v970, 0.0
  %v976 = vadd.f32 %v974, %v975
  %v977 = vsel %vm22, %v971, 0.0
  %v978 = vadd.f32 %v976, %v977
  %v979 = vrot.slane %v978, 4
  %v980 = vadd.f32 %v978, %v979
  %v981 = vrot.slane %v980, 2
  %v982 = vadd.f32 %v980, %v981
  %v983 = vrot.slane %v982, 1
  %v984 = vadd.f32 %v982, %v983
  %v985 = vmul.f32 %v984, %v526
  %v986 = vadd.f32 %v985, 1e-05
  %v987 = vrsqrt.pop %v986
  %v988 = vmul.f32 %v964, %v987
  %v989 = vmul.f32 %v965, %v987
  %v990 = vmul.f32 %v966, %v987
  %v991 = vmul.f32 %v967, %v987
  %v992 = vlaneseq
  %v993 = vshrl.u32 %v992, 7
  %v994 = vsub.s32 5, %v993
  %v995 = vrot.slane %v21, %v994
  %v996 = vmul.f32 %v988, %v995
  %v997 = vmul.f32 %v989, %v995
  %v998 = vmul.f32 %v990, %v995
  %v999 = vmul.f32 %v991, %v995
  %v1000 = vlaneseq
  %v1001 = vshrl.u32 %v1000, 7
  %v1002 = vsub.s32 6, %v1001
  %v1003 = vrot.slane %v21, %v1002
  %v1004 = vadd.f32 %v996, %v1003
  %v1005 = vadd.f32 %v997, %v1003
  %v1006 = vadd.f32 %v998, %v1003
  %v1007 = vadd.f32 %v999, %v1003
  %v1008 = vmax.f32 %v1004, 0.0
  %v1009 = vmax.f32 %v1005, 0.0
  %v1010 = vmax.f32 %v1006, 0.0
  %v1011 = vmax.f32 %v1007, 0.0
  %v1012 = vld [vmem:[%s3 + $0x48] sm:$0xff]
  %v1013 = vld [vmem:[%s3 + $0x50] sm:$0xff]
  %v1014 = vld [vmem:[%s3 + $0x58] sm:$0xff]
  %v1015 = vld [vmem:[%s3 + $0x60] sm:$0xff]
  %v1016 = vlaneseq
  %v1017 = vshrl.u32 %v1016, 7
  %v1018 = vsub.s32 7, %v1017
  %v1019 = vrot.slane %v21, %v1018
  %v1021 = vsel %vm22, %v1008, 0
  %v1024 = vsel %vm22, %v1009, 0
  %v1027 = vsel %vm22, %v1010, 0
  %v1030 = vsel %vm22, %v1011, 0
  %1032 = vmatprep.subr.mxu0 0.0
  %1033 = vmatpush1.msra.mxu0 0.0
  %1034 = vmatprep.subr.mxu0 0.0
  %1035 = vmatpush1.msra.mxu0 0.0
  %1036 = vmatprep.subr.mxu0 0.0
  %1037 = vmatpush1.msra.mxu0 0.0
  %1038 = vmatprep.subr.mxu0 0.0
  %1039 = vmatpush1.msra.mxu0 0.0
  %1040 = vmatprep.subr.mxu0 0.0
  %1041 = vmatpush1.msra.mxu0 0.0
  %1042 = vmatprep.subr.mxu0 0.0
  %1043 = vmatpush1.msra.mxu0 0.0
  %1044 = vmatprep.subr.mxu0 0.0
  %1045 = vmatpush1.msra.mxu0 0.0
  %1046 = vmatprep.subr.mxu0 0.0
  %1047 = vmatpush1.msra.mxu0 0.0
  %1048 = vmatprep.subr.mxu0 0.0
  %1049 = vmatpush1.msra.mxu0 0.0
  %1050 = vmatprep.subr.mxu0 0.0
  %1051 = vmatpush1.msra.mxu0 0.0
  %1052 = vmatprep.subr.mxu0 0.0
  %1053 = vmatpush1.msra.mxu0 0.0
  %1054 = vmatprep.subr.mxu0 0.0
  %1055 = vmatpush1.msra.mxu0 0.0
  %1056 = vmatprep.subr.mxu0 0.0
  %1057 = vmatpush1.msra.mxu0 %v1015
  %1058 = vmatprep.subr.mxu0 0.0
  %1059 = vmatpush1.msra.mxu0 %v1014
  %1060 = vmatprep.subr.mxu0 0.0
  %1061 = vmatpush1.msra.mxu0 %v1013
  %1062 = vmatprep.subr.mxu0 0.0
  %1063 = vmatpush1.msra.mxu0 %v1012
  %1064 = vmatprep.subr.mxu0 0.0
  %1065 = vmatpush2.msra.mxu0 0.0
  %1066 = vmatprep.subr.mxu0 0.0
  %1067 = vmatpush2.msra.mxu0 0.0
  %1068 = vmatprep.subr.mxu0 0.0
  %1069 = vmatpush2.msra.mxu0 0.0
  %1070 = vmatprep.subr.mxu0 0.0
  %1071 = vmatpush2.msra.mxu0 0.0
  %1072 = vmatprep.subr.mxu0 0.0
  %1073 = vmatpush2.msra.mxu0 0.0
  %1074 = vmatprep.subr.mxu0 0.0
  %1075 = vmatpush2.msra.mxu0 0.0
  %1076 = vmatprep.subr.mxu0 0.0
  %1077 = vmatpush2.msra.mxu0 0.0
  %1078 = vmatprep.subr.mxu0 0.0
  %1079 = vmatpush2.msra.mxu0 0.0
  %1080 = vmatprep.subr.mxu0 0.0
  %1081 = vmatpush2.msra.mxu0 0.0
  %1082 = vmatprep.subr.mxu0 0.0
  %1083 = vmatpush2.msra.mxu0 0.0
  %1084 = vmatprep.subr.mxu0 0.0
  %1085 = vmatpush2.msra.mxu0 0.0
  %1086 = vmatprep.subr.mxu0 0.0
  %1087 = vmatpush2.msra.mxu0 0.0
  %1088 = vmatprep.subr.mxu0 0.0
  %1089 = vmatpush2.msra.mxu0 0.0
  %1090 = vmatprep.subr.mxu0 0.0
  %1091 = vmatpush2.msra.mxu0 0.0
  %1092 = vmatprep.subr.mxu0 0.0
  %1093 = vmatpush2.msra.mxu0 0.0
  %1094 = vmatprep.subr.mxu0 0.0
  %1095 = vmatpush2.msra.mxu0 0.0
  %1096 = vmatprep.mubr.f32.mxu0 0.0
  %1097 = vmatmul.mubr.f32.gmra.mxu0 %v1021
  %v1098 = vpop.f32.mrf.mxu0
  %v1099 = vadd.f32 %v1019, %v1098
  %v1100 = vpop.f32.mrf.mxu0
  %1101 = vmatprep.mubr.f32.mxu0 0.0
  %1102 = vmatmul.mubr.f32.gmra.mxu0 %v1024
  %v1103 = vpop.f32.mrf.mxu0
  %v1104 = vadd.f32 %v1019, %v1103
  %v1105 = vpop.f32.mrf.mxu0
  %1106 = vmatprep.mubr.f32.mxu0 0.0
  %1107 = vmatmul.mubr.f32.gmra.mxu0 %v1027
  %v1108 = vpop.f32.mrf.mxu0
  %v1109 = vadd.f32 %v1019, %v1108
  %v1110 = vpop.f32.mrf.mxu0
  %1111 = vmatprep.mubr.f32.mxu0 0.0
  %1112 = vmatmul.mubr.f32.gmra.mxu0 %v1030
  %v1113 = vpop.f32.mrf.mxu0
  %v1114 = vadd.f32 %v1019, %v1113
  %v1115 = vpop.f32.mrf.mxu0
  %1116 = vdwg.mxu0
  %vm1117 = vcmask 31744
  %1118 = vst.msk [vmem:[%s4] sm:$0xff] %vm1117, %v1099
  %1119 = vst.msk [vmem:[%s4 + $0x8] sm:$0xff] %vm1117, %v1104
  %1120 = vst.msk [vmem:[%s4 + $0x10] sm:$0xff] %vm1117, %v1109
  %1121 = vst.msk [vmem:[%s4 + $0x18] sm:$0xff] %vm1117, %v1114
  // Predicated region
  $region18: #{gipa_forward.1} parent=0 // pred_check
    _
  $region19: #{gipa_forward.1} parent=0 // pred_check_branch
    %1123 = sbr.rel (0) target = $region21
  $region20: #{gipa_forward.1} parent=0 // pred_region
    _
  $region21: #{gipa_forward.1} parent=0 // pred_fallthru
    _
  // Predicated region
  $region22: #{gipa_forward.1} parent=0 // pred_check
    _
  $region23: #{gipa_forward.1} parent=0 // pred_check_branch
    %1125 = sbr.rel (0) target = $region25
  $region24: #{gipa_forward.1} parent=0 // pred_region
    _
  $region25: #{gipa_forward.1} parent=0 // pred_fallthru
    _

</llo_original>
